<compile_context>
chip_gen: v5e
topology: v5e:2x2
jax: 0.10.0
libtpu: 0.0.40
codegen_flags: <defaults>
</compile_context>

<pallas_src>
import jax
import jax.numpy as jnp
from jax.experimental import pallas as pl
from jax.experimental.pallas import tpu as pltpu


def identity_copy_kernel(x_hbm, o_hbm, sem):
    """Whole-array HBM->HBM DMA: o = x. No VMEM staging, no grid, no tiling."""
    cp = pltpu.make_async_copy(x_hbm, o_hbm, sem)
    cp.start()
    cp.wait()


def _identity_copy(x: jax.Array) -> jax.Array:
    """Materialize a fresh copy of x via a single DMA (any shape, any dtype)."""
    n_bytes = x.size * jnp.dtype(x.dtype).itemsize
    return pl.pallas_call(
        identity_copy_kernel,
        out_shape=jax.ShapeDtypeStruct(x.shape, x.dtype),
        in_specs=[pl.BlockSpec(memory_space=pl.ANY)],   # raw HBM ref, no auto-DMA
        out_specs=pl.BlockSpec(memory_space=pl.ANY),    # raw HBM ref
        scratch_shapes=[pltpu.SemaphoreType.DMA(())],
        cost_estimate=pl.CostEstimate(
            flops=0, transcendentals=0, bytes_accessed=2 * n_bytes),
        compiler_params=pltpu.CompilerParams(has_side_effects=True),
    )(x)


def identity(x: jax.Array, *, copy: bool = False) -> jax.Array:
    """Identity: y = x.

    copy=False (default): true no-op — returns x without launching a kernel.
    copy=True: returns a freshly materialized buffer via the Pallas DMA kernel.
    """
    if not copy:
        return x
    if x.size == 0:
        return x
    if x.ndim == 0:
        # DMA wants at least 1-D; a reshape of a scalar is free.
        return _identity_copy(x.reshape(1)).reshape(())
    return _identity_copy(x)


class IdentityModule:
    """Mirror of the PyTorch Identity module (no parameters)."""

    def __init__(self, d: int, materialize: bool = False):
        self.in_features = d
        self.out_features = d
        self.materialize = materialize

    def __call__(self, x: jax.Array) -> jax.Array:
        return identity(x, copy=self.materialize)


if __name__ == "__main__":
    key = jax.random.PRNGKey(0)
    batch, d = 2, 32
    x = jax.random.normal(key, (batch, d), dtype=jnp.float32)

    # Default module: zero-copy identity (no kernel launch) — review item 1.
    mod = IdentityModule(d)
    y = mod(x)
    jax.block_until_ready(y)
    assert y.shape == x.shape and y.dtype == x.dtype
    assert bool(jnp.all(y == x))

    # Materializing module: runs the Pallas HBM->HBM DMA kernel.
    mod_copy = IdentityModule(d, materialize=True)
    y_copy = mod_copy(x)
    jax.block_until_ready(y_copy)
    assert y_copy.shape == x.shape and y_copy.dtype == x.dtype
    assert bool(jnp.all(y_copy == x))

    # Awkward (non-multiple-of-128) shape: same DMA path, no tiling fallback,
    # no VMEM-size cliff (this was the robustness bug in the previous version).
    x_odd = jax.random.normal(key, (3, 5, 7), dtype=jnp.float32)
    y_odd = identity(x_odd, copy=True)
    jax.block_until_ready(y_odd)
    assert y_odd.shape == x_odd.shape and y_odd.dtype == x_odd.dtype
    assert bool(jnp.all(y_odd == x_odd))

    print("KERNEL_OK")
</pallas_src>

<mosaic_0001>
module attributes {stable_mosaic.version = 11 : i64} {
  func.func @identity_copy_kernel(%arg0: memref<2x32xf32, #tpu.memory_space<any>>, %arg1: memref<2x32xf32, #tpu.memory_space<any>>, %arg2: memref<!tpu.dma_semaphore, #tpu.memory_space<semaphore_mem>>) attributes {dimension_semantics = [], scalar_prefetch = 0 : i64, scratch_operands = 1 : i64, tpu.core_type = #tpu.core_type<tc>} {
    tpu.enqueue_dma source(%arg0 : memref<2x32xf32, #tpu.memory_space<any>>) target(%arg1 : memref<2x32xf32, #tpu.memory_space<any>>) target_semaphore(%arg2 : memref<!tpu.dma_semaphore, #tpu.memory_space<semaphore_mem>>)
    tpu.wait_dma2 semaphore(%arg2 : memref<!tpu.dma_semaphore, #tpu.memory_space<semaphore_mem>>) src(%arg0 : memref<2x32xf32, #tpu.memory_space<any>>) dst(%arg1 : memref<2x32xf32, #tpu.memory_space<any>>)
    return
  }
}

</mosaic_0001>

<llo_original>
// kernel: tpu_custom_call.1
$region0: #{tpu_custom_call.1}
  #allocation0 [shape = 'u32[]', space=smem, size = 0x4, offset = 0x4, fixed_abs, tag = 'smem constant byte address 0x4 - core index']
  #allocation1 [shape = 'u32[72,128]{1,0:T(1,128)}', space=vmem, size = 0x9000, scoped, tag = 'internal scratch']
  #allocation2 [shape = 's32[1]{0}', space=sflag, size = 0x4, scoped, tag = 'scratch operand']
  #allocation3 [shape = 's32[]', space=sflag, size = 0x4, offset = 0, fixed_abs, tag = 'sflag constant byte address 0x0 - dummy sync flag']
  #allocation4 [shape = 'u32[0]{0}', space=smem, size = 0, offset = 0, fixed_abs, tag = 'smem constant byte address 0x0 - null']
  %s0 = inlined_call_operand.hbm [shape: f32[2,32], index: 0, kind: input, shape index: {}]
  %s1 = inlined_call_operand.hbm [shape: f32[2,32], index: 1, kind: output, shape index: {}]
  %s2 = sld [smem:[#allocation0]]
  $region2: #{tpu_custom_call.1} parent=0
    _
  %s4 = ssub.s32 1, %s2
  %s5 = scalar_select 0, %s4, %s2
  %s7 = sshll.u32 1, 14
  %s8 = sxor.u32 4294967295, %s7
  %s10 = sshll.u32 %s0, 4
  %s11 = int_to_ptr.hbm [resolvable:$true] %s10
  %s12 = sshll.u32 %s1, 4
  %s13 = int_to_ptr.hbm [resolvable:$true] %s12
  %16 = dma.general %s11, 32, %s13, [#allocation2], [#allocation3], [#allocation4], 0, 0
  %s17 = smul.u32 2, 1
  %s18 = sshll.u32 %s17, 4
  %19 = dma.done [#allocation2], %s18
  %20 = vsyncmov [#allocation2]
  %s21 = vpop.sfrf %20
  %p22 = scmp.eq.s32.totalorder %s21, 0
  %p23 = pneg %p22
  %25 = shalt.err (%p23)

</llo_original>
